<compile_context>
chip_gen: v7x
topology: tpu7x:2x2x1
jax: 0.10.0
libtpu: 0.0.40
codegen_flags: <defaults>
</compile_context>

<pallas_src>
import functools
import math

import jax
import jax.numpy as jnp
from jax.experimental import pallas as pl
from jax.experimental.pallas import tpu as pltpu

VMEM = pltpu.MemorySpace.VMEM
LANE = 128  # TPU lane width: gate / hidden / vocab axes are padded to this.


# ---------------------------------------------------------------------------
# Fused kernel: all GRU layers + output projection in one invocation.
# ---------------------------------------------------------------------------
def fused_decoder_step_kernel(x_ref, h0_ref, wih_ref, whh_ref,
                              brz_ref, bin_ref, bhn_ref, wout_ref, bout_ref,
                              pred_ref, hout_ref):
    """Shapes (P = LANE-padded feature width, Vp = LANE-padded vocab):
      x_ref    : (B, P)      padded input embedding
      h0_ref   : (L, B, P)   padded previous hidden state
      wih_ref  : (L, P, 3P)  x->gates weights; each gate owns one 128-lane tile
      whh_ref  : (L, P, 3P)  h->gates weights
      brz_ref  : (L, 1, 2P)  pre-summed (b_ih + b_hh) biases for r and z
      bin_ref  : (L, 1, P)   input bias for n gate
      bhn_ref  : (L, 1, P)   hidden bias for n gate
      wout_ref : (P, Vp)     output projection weights
      bout_ref : (1, Vp)     output projection bias
      pred_ref : (B, Vp)     logits (lane-dense)
      hout_ref : (L, B, P)   new hidden state
    """
    P = x_ref.shape[-1]
    n_layers = h0_ref.shape[0]

    x = x_ref[...]
    for layer in range(n_layers):        # tiny L: fully unrolled at trace time
        h = h0_ref[layer]
        gi = jnp.dot(x, wih_ref[layer], preferred_element_type=jnp.float32)
        gh = jnp.dot(h, whh_ref[layer], preferred_element_type=jnp.float32)
        # Gate slice points are multiples of 128 -> whole-vreg slices, no masks.
        rz = jax.nn.sigmoid(gi[:, :2 * P] + gh[:, :2 * P] + brz_ref[layer])
        r = rz[:, :P]
        z = rz[:, P:]
        n = jnp.tanh(gi[:, 2 * P:] + bin_ref[layer]
                     + r * (gh[:, 2 * P:] + bhn_ref[layer]))
        h_new = (1.0 - z) * n + z * h
        hout_ref[layer] = h_new
        x = h_new                         # next layer input (eval: no dropout)

    pred_ref[...] = (
        jnp.dot(x, wout_ref[...], preferred_element_type=jnp.float32)
        + bout_ref[...]
    )


# ---------------------------------------------------------------------------
# Host-side wrapper (padding is init-time for weights, tiny pads per call for
# activations — pure layout plumbing).
# ---------------------------------------------------------------------------
def _round_up(n, m):
    return ((n + m - 1) // m) * m


def _pad_gate_cols(w_t, P):
    """(in_dim, 3H) -> (P, 3P) with gate g occupying columns [g*P, g*P + H)."""
    in_dim, three_h = w_t.shape
    H = three_h // 3
    assert in_dim <= P and H <= P
    out = jnp.zeros((P, 3 * P), jnp.float32)
    for g in range(3):
        out = out.at[:in_dim, g * P:g * P + H].set(w_t[:, g * H:(g + 1) * H])
    return out


def _decoder_step(params, last_word, last_hidden, emb_dim, hid_dim, vocab_size):
    n_layers, batch, _ = last_hidden.shape
    P = LANE
    Vp = params["wout"].shape[1]

    # Pad activations into lane-aligned slabs (also performs the f32 cast).
    x = jnp.zeros((batch, P), jnp.float32).at[:, :emb_dim].set(
        last_word[0].astype(jnp.float32))
    h0 = jnp.zeros((n_layers, batch, P), jnp.float32).at[:, :, :hid_dim].set(
        last_hidden.astype(jnp.float32))

    pred_p, hout_p = pl.pallas_call(
        fused_decoder_step_kernel,
        out_shape=(jax.ShapeDtypeStruct((batch, Vp), jnp.float32),
                   jax.ShapeDtypeStruct((n_layers, batch, P), jnp.float32)),
        in_specs=[pl.BlockSpec(memory_space=VMEM)] * 9,
        out_specs=(pl.BlockSpec(memory_space=VMEM),
                   pl.BlockSpec(memory_space=VMEM)),
    )(x, h0, params["wih"], params["whh"],
      params["brz"], params["b_in"], params["b_hn"],
      params["wout"], params["bout"])

    return pred_p[:, :vocab_size], hout_p[:, :, :hid_dim]


class GRUDecoderPallas:
    """Per-step GRU decoder (PyTorch nn.GRU + nn.Linear semantics), Pallas-fused."""

    def __init__(self, emb_dim, vocab_size, hid_dim, n_layers, dropout, key):
        self.emb_dim = emb_dim
        self.vocab_size = vocab_size
        self.hid_dim = hid_dim
        self.n_layers = n_layers
        self.dropout = dropout  # inter-layer GRU dropout is training-only; skipped

        k = 1.0 / math.sqrt(hid_dim)
        keys = jax.random.split(key, 4 * n_layers + 2)
        ki = iter(range(len(keys)))

        # TODO(synk): nn.Embedding weights are never used in decoder.forward();
        # not materialized here.
        self.raw_layers = []
        wih_l, whh_l, brz_l, bin_l, bhn_l = [], [], [], [], []
        H = hid_dim
        for layer in range(n_layers):
            in_dim = emb_dim if layer == 0 else hid_dim
            w_ih = jax.random.uniform(keys[next(ki)], (3 * H, in_dim),
                                      jnp.float32, -k, k)
            w_hh = jax.random.uniform(keys[next(ki)], (3 * H, H),
                                      jnp.float32, -k, k)
            b_ih = jax.random.uniform(keys[next(ki)], (3 * H,),
                                      jnp.float32, -k, k)
            b_hh = jax.random.uniform(keys[next(ki)], (3 * H,),
                                      jnp.float32, -k, k)
            self.raw_layers.append((w_ih, w_hh, b_ih, b_hh))

            wih_l.append(_pad_gate_cols(w_ih.T, LANE))
            whh_l.append(_pad_gate_cols(w_hh.T, LANE))
            b_rz = b_ih[:2 * H] + b_hh[:2 * H]          # pre-summed r/z biases
            brz = (jnp.zeros((1, 2 * LANE), jnp.float32)
                   .at[0, :H].set(b_rz[:H])
                   .at[0, LANE:LANE + H].set(b_rz[H:]))
            b_in = jnp.zeros((1, LANE), jnp.float32).at[0, :H].set(b_ih[2 * H:])
            b_hn = jnp.zeros((1, LANE), jnp.float32).at[0, :H].set(b_hh[2 * H:])
            brz_l.append(brz)
            bin_l.append(b_in)
            bhn_l.append(b_hn)

        w_out = jax.random.uniform(keys[next(ki)], (vocab_size, H),
                                   jnp.float32, -k, k)
        b_out = jax.random.uniform(keys[next(ki)], (vocab_size,),
                                   jnp.float32, -k, k)
        self.raw_out = (w_out, b_out)

        Vp = _round_up(vocab_size, LANE)                # lane-dense logits store
        wout = jnp.zeros((LANE, Vp), jnp.float32).at[:H, :vocab_size].set(w_out.T)
        bout = jnp.zeros((1, Vp), jnp.float32).at[0, :vocab_size].set(b_out)

        self.params = dict(
            wih=jnp.stack(wih_l), whh=jnp.stack(whh_l),
            brz=jnp.stack(brz_l), b_in=jnp.stack(bin_l), b_hn=jnp.stack(bhn_l),
            wout=wout, bout=bout)

        self._step = jax.jit(functools.partial(
            _decoder_step, emb_dim=emb_dim, hid_dim=hid_dim,
            vocab_size=vocab_size))

    def __call__(self, last_word, last_hidden):
        # last_word: (1, B, emb_dim), last_hidden: (n_layers, B, hid_dim)
        return self._step(self.params, last_word, last_hidden)


# ---------------------------------------------------------------------------
# Pure-JAX reference (un-padded PyTorch math) for a sanity check.
# ---------------------------------------------------------------------------
def reference_forward(model, last_word, last_hidden):
    x = last_word[0].astype(jnp.float32)
    H = model.hid_dim
    hs = []
    for layer, (w_ih, w_hh, b_ih, b_hh) in enumerate(model.raw_layers):
        h = last_hidden[layer].astype(jnp.float32)
        gi = x @ w_ih.T + b_ih
        gh = h @ w_hh.T + b_hh
        r = jax.nn.sigmoid(gi[:, :H] + gh[:, :H])
        z = jax.nn.sigmoid(gi[:, H:2 * H] + gh[:, H:2 * H])
        n = jnp.tanh(gi[:, 2 * H:] + r * gh[:, 2 * H:])
        h = (1.0 - z) * n + z * h
        hs.append(h)
        x = h
    w_out, b_out = model.raw_out
    pred = x @ w_out.T + b_out
    return pred, jnp.stack(hs, axis=0)


if __name__ == "__main__":
    emb_dim, hid_dim, n_layers, vocab_size, batch = 16, 32, 2, 50, 4

    key = jax.random.PRNGKey(0)
    k_model, k_word, k_hidden = jax.random.split(key, 3)

    model = GRUDecoderPallas(emb_dim, vocab_size, hid_dim, n_layers,
                             dropout=0.1, key=k_model)

    last_word = jax.random.normal(k_word, (1, batch, emb_dim), jnp.float32)
    last_hidden = jax.random.normal(k_hidden, (n_layers, batch, hid_dim),
                                    jnp.float32)

    prediction, new_hidden = model(last_word, last_hidden)
    prediction = jax.block_until_ready(prediction)
    new_hidden = jax.block_until_ready(new_hidden)

    assert prediction.shape == (batch, vocab_size)
    assert new_hidden.shape == (n_layers, batch, hid_dim)

    ref_pred, ref_hidden = reference_forward(model, last_word, last_hidden)
    assert jnp.allclose(prediction, ref_pred, atol=1e-4, rtol=1e-4)
    assert jnp.allclose(new_hidden, ref_hidden, atol=1e-4, rtol=1e-4)

    print("KERNEL_OK")
</pallas_src>

<mosaic_0001>
module attributes {stable_mosaic.version = 11 : i64} {
  func.func @fused_decoder_step_kernel(%arg0: memref<4x128xf32, #tpu.memory_space<vmem>>, %arg1: memref<2x4x128xf32, #tpu.memory_space<vmem>>, %arg2: memref<2x128x384xf32, #tpu.memory_space<vmem>>, %arg3: memref<2x128x384xf32, #tpu.memory_space<vmem>>, %arg4: memref<2x1x256xf32, #tpu.memory_space<vmem>>, %arg5: memref<2x1x128xf32, #tpu.memory_space<vmem>>, %arg6: memref<2x1x128xf32, #tpu.memory_space<vmem>>, %arg7: memref<128x128xf32, #tpu.memory_space<vmem>>, %arg8: memref<1x128xf32, #tpu.memory_space<vmem>>, %arg9: memref<4x128xf32, #tpu.memory_space<vmem>>, %arg10: memref<2x4x128xf32, #tpu.memory_space<vmem>>) attributes {dimension_semantics = [], scalar_prefetch = 0 : i64, scratch_operands = 0 : i64, tpu.core_type = #tpu.core_type<tc>} {
    %c0 = arith.constant 0 : index
    %c0_0 = arith.constant 0 : index
    %0 = vector.load %arg0[%c0, %c0_0] : memref<4x128xf32, #tpu.memory_space<vmem>>, vector<4x128xf32>
    %c0_1 = arith.constant 0 : index
    %c0_2 = arith.constant 0 : index
    %c0_3 = arith.constant 0 : index
    %1 = vector.load %arg1[%c0_1, %c0_2, %c0_3] : memref<2x4x128xf32, #tpu.memory_space<vmem>>, vector<1x4x128xf32>
    %2 = vector.shape_cast %1 : vector<1x4x128xf32> to vector<4x128xf32>
    %c0_4 = arith.constant 0 : index
    %c0_5 = arith.constant 0 : index
    %c0_6 = arith.constant 0 : index
    %3 = vector.load %arg2[%c0_4, %c0_5, %c0_6] : memref<2x128x384xf32, #tpu.memory_space<vmem>>, vector<1x128x384xf32>
    %4 = vector.shape_cast %3 : vector<1x128x384xf32> to vector<128x384xf32>
    %cst = arith.constant dense<0.000000e+00> : vector<4x384xf32>
    %5 = tpu.matmul %0, %4, %cst {dimension_numbers = #tpu.dot_dimension_numbers<[1], [0], [0], [1], [0, 0, 1, 1], [], []>} : vector<4x128xf32>, vector<128x384xf32>, vector<4x384xf32> -> vector<4x384xf32>
    %c0_7 = arith.constant 0 : index
    %c0_8 = arith.constant 0 : index
    %c0_9 = arith.constant 0 : index
    %6 = vector.load %arg3[%c0_7, %c0_8, %c0_9] : memref<2x128x384xf32, #tpu.memory_space<vmem>>, vector<1x128x384xf32>
    %7 = vector.shape_cast %6 : vector<1x128x384xf32> to vector<128x384xf32>
    %cst_10 = arith.constant dense<0.000000e+00> : vector<4x384xf32>
    %8 = tpu.matmul %2, %7, %cst_10 {dimension_numbers = #tpu.dot_dimension_numbers<[1], [0], [0], [1], [0, 0, 1, 1], [], []>} : vector<4x128xf32>, vector<128x384xf32>, vector<4x384xf32> -> vector<4x384xf32>
    %9 = vector.extract_strided_slice %5 {offsets = [0, 0], sizes = [4, 256], strides = [1, 1]} : vector<4x384xf32> to vector<4x256xf32>
    %10 = vector.extract_strided_slice %8 {offsets = [0, 0], sizes = [4, 256], strides = [1, 1]} : vector<4x384xf32> to vector<4x256xf32>
    %11 = arith.addf %9, %10 : vector<4x256xf32>
    %c0_11 = arith.constant 0 : index
    %c0_12 = arith.constant 0 : index
    %c0_13 = arith.constant 0 : index
    %12 = vector.load %arg4[%c0_11, %c0_12, %c0_13] : memref<2x1x256xf32, #tpu.memory_space<vmem>>, vector<1x1x256xf32>
    %13 = vector.shape_cast %12 : vector<1x1x256xf32> to vector<1x256xf32>
    %14 = vector.broadcast %13 : vector<1x256xf32> to vector<4x256xf32>
    %15 = arith.addf %11, %14 : vector<4x256xf32>
    %16 = arith.negf %15 : vector<4x256xf32>
    %17 = math.exp %16 : vector<4x256xf32>
    %cst_14 = arith.constant 1.000000e+00 : f32
    %18 = vector.broadcast %cst_14 : f32 to vector<4x256xf32>
    %19 = arith.addf %18, %17 : vector<4x256xf32>
    %20 = arith.divf %18, %19 : vector<4x256xf32>
    %21 = vector.extract_strided_slice %20 {offsets = [0, 0], sizes = [4, 128], strides = [1, 1]} : vector<4x256xf32> to vector<4x128xf32>
    %22 = vector.extract_strided_slice %20 {offsets = [0, 128], sizes = [4, 128], strides = [1, 1]} : vector<4x256xf32> to vector<4x128xf32>
    %23 = vector.extract_strided_slice %5 {offsets = [0, 256], sizes = [4, 128], strides = [1, 1]} : vector<4x384xf32> to vector<4x128xf32>
    %c0_15 = arith.constant 0 : index
    %c0_16 = arith.constant 0 : index
    %c0_17 = arith.constant 0 : index
    %24 = vector.load %arg5[%c0_15, %c0_16, %c0_17] : memref<2x1x128xf32, #tpu.memory_space<vmem>>, vector<1x1x128xf32>
    %25 = vector.shape_cast %24 : vector<1x1x128xf32> to vector<1x128xf32>
    %26 = vector.broadcast %25 : vector<1x128xf32> to vector<4x128xf32>
    %27 = arith.addf %23, %26 : vector<4x128xf32>
    %28 = vector.extract_strided_slice %8 {offsets = [0, 256], sizes = [4, 128], strides = [1, 1]} : vector<4x384xf32> to vector<4x128xf32>
    %c0_18 = arith.constant 0 : index
    %c0_19 = arith.constant 0 : index
    %c0_20 = arith.constant 0 : index
    %29 = vector.load %arg6[%c0_18, %c0_19, %c0_20] : memref<2x1x128xf32, #tpu.memory_space<vmem>>, vector<1x1x128xf32>
    %30 = vector.shape_cast %29 : vector<1x1x128xf32> to vector<1x128xf32>
    %31 = vector.broadcast %30 : vector<1x128xf32> to vector<4x128xf32>
    %32 = arith.addf %28, %31 : vector<4x128xf32>
    %33 = arith.mulf %21, %32 : vector<4x128xf32>
    %34 = arith.addf %27, %33 : vector<4x128xf32>
    %35 = math.tanh %34 : vector<4x128xf32>
    %cst_21 = arith.constant 1.000000e+00 : f32
    %36 = vector.broadcast %cst_21 : f32 to vector<4x128xf32>
    %37 = arith.subf %36, %22 : vector<4x128xf32>
    %38 = arith.mulf %37, %35 : vector<4x128xf32>
    %39 = arith.mulf %22, %2 : vector<4x128xf32>
    %40 = arith.addf %38, %39 : vector<4x128xf32>
    %c0_22 = arith.constant 0 : index
    %c0_23 = arith.constant 0 : index
    %c0_24 = arith.constant 0 : index
    %41 = vector.load %arg10[%c0_22, %c0_23, %c0_24] : memref<2x4x128xf32, #tpu.memory_space<vmem>>, vector<1x4x128xf32>
    %42 = vector.shape_cast %41 : vector<1x4x128xf32> to vector<4x128xf32>
    %43 = vector.shape_cast %40 : vector<4x128xf32> to vector<1x4x128xf32>
    tpu.vector_store %arg10[%c0_22, %c0_23, %c0_24], %43 {strides = array<i32>} : memref<2x4x128xf32, #tpu.memory_space<vmem>>, vector<1x4x128xf32>,
    %c1 = arith.constant 1 : index
    %c0_25 = arith.constant 0 : index
    %c0_26 = arith.constant 0 : index
    %44 = vector.load %arg1[%c1, %c0_25, %c0_26] : memref<2x4x128xf32, #tpu.memory_space<vmem>>, vector<1x4x128xf32>
    %45 = vector.shape_cast %44 : vector<1x4x128xf32> to vector<4x128xf32>
    %c1_27 = arith.constant 1 : index
    %c0_28 = arith.constant 0 : index
    %c0_29 = arith.constant 0 : index
    %46 = vector.load %arg2[%c1_27, %c0_28, %c0_29] : memref<2x128x384xf32, #tpu.memory_space<vmem>>, vector<1x128x384xf32>
    %47 = vector.shape_cast %46 : vector<1x128x384xf32> to vector<128x384xf32>
    %cst_30 = arith.constant dense<0.000000e+00> : vector<4x384xf32>
    %48 = tpu.matmul %40, %47, %cst_30 {dimension_numbers = #tpu.dot_dimension_numbers<[1], [0], [0], [1], [0, 0, 1, 1], [], []>} : vector<4x128xf32>, vector<128x384xf32>, vector<4x384xf32> -> vector<4x384xf32>
    %c1_31 = arith.constant 1 : index
    %c0_32 = arith.constant 0 : index
    %c0_33 = arith.constant 0 : index
    %49 = vector.load %arg3[%c1_31, %c0_32, %c0_33] : memref<2x128x384xf32, #tpu.memory_space<vmem>>, vector<1x128x384xf32>
    %50 = vector.shape_cast %49 : vector<1x128x384xf32> to vector<128x384xf32>
    %cst_34 = arith.constant dense<0.000000e+00> : vector<4x384xf32>
    %51 = tpu.matmul %45, %50, %cst_34 {dimension_numbers = #tpu.dot_dimension_numbers<[1], [0], [0], [1], [0, 0, 1, 1], [], []>} : vector<4x128xf32>, vector<128x384xf32>, vector<4x384xf32> -> vector<4x384xf32>
    %52 = vector.extract_strided_slice %48 {offsets = [0, 0], sizes = [4, 256], strides = [1, 1]} : vector<4x384xf32> to vector<4x256xf32>
    %53 = vector.extract_strided_slice %51 {offsets = [0, 0], sizes = [4, 256], strides = [1, 1]} : vector<4x384xf32> to vector<4x256xf32>
    %54 = arith.addf %52, %53 : vector<4x256xf32>
    %c1_35 = arith.constant 1 : index
    %c0_36 = arith.constant 0 : index
    %c0_37 = arith.constant 0 : index
    %55 = vector.load %arg4[%c1_35, %c0_36, %c0_37] : memref<2x1x256xf32, #tpu.memory_space<vmem>>, vector<1x1x256xf32>
    %56 = vector.shape_cast %55 : vector<1x1x256xf32> to vector<1x256xf32>
    %57 = vector.broadcast %56 : vector<1x256xf32> to vector<4x256xf32>
    %58 = arith.addf %54, %57 : vector<4x256xf32>
    %59 = arith.negf %58 : vector<4x256xf32>
    %60 = math.exp %59 : vector<4x256xf32>
    %cst_38 = arith.constant 1.000000e+00 : f32
    %61 = vector.broadcast %cst_38 : f32 to vector<4x256xf32>
    %62 = arith.addf %61, %60 : vector<4x256xf32>
    %63 = arith.divf %61, %62 : vector<4x256xf32>
    %64 = vector.extract_strided_slice %63 {offsets = [0, 0], sizes = [4, 128], strides = [1, 1]} : vector<4x256xf32> to vector<4x128xf32>
    %65 = vector.extract_strided_slice %63 {offsets = [0, 128], sizes = [4, 128], strides = [1, 1]} : vector<4x256xf32> to vector<4x128xf32>
    %66 = vector.extract_strided_slice %48 {offsets = [0, 256], sizes = [4, 128], strides = [1, 1]} : vector<4x384xf32> to vector<4x128xf32>
    %c1_39 = arith.constant 1 : index
    %c0_40 = arith.constant 0 : index
    %c0_41 = arith.constant 0 : index
    %67 = vector.load %arg5[%c1_39, %c0_40, %c0_41] : memref<2x1x128xf32, #tpu.memory_space<vmem>>, vector<1x1x128xf32>
    %68 = vector.shape_cast %67 : vector<1x1x128xf32> to vector<1x128xf32>
    %69 = vector.broadcast %68 : vector<1x128xf32> to vector<4x128xf32>
    %70 = arith.addf %66, %69 : vector<4x128xf32>
    %71 = vector.extract_strided_slice %51 {offsets = [0, 256], sizes = [4, 128], strides = [1, 1]} : vector<4x384xf32> to vector<4x128xf32>
    %c1_42 = arith.constant 1 : index
    %c0_43 = arith.constant 0 : index
    %c0_44 = arith.constant 0 : index
    %72 = vector.load %arg6[%c1_42, %c0_43, %c0_44] : memref<2x1x128xf32, #tpu.memory_space<vmem>>, vector<1x1x128xf32>
    %73 = vector.shape_cast %72 : vector<1x1x128xf32> to vector<1x128xf32>
    %74 = vector.broadcast %73 : vector<1x128xf32> to vector<4x128xf32>
    %75 = arith.addf %71, %74 : vector<4x128xf32>
    %76 = arith.mulf %64, %75 : vector<4x128xf32>
    %77 = arith.addf %70, %76 : vector<4x128xf32>
    %78 = math.tanh %77 : vector<4x128xf32>
    %cst_45 = arith.constant 1.000000e+00 : f32
    %79 = vector.broadcast %cst_45 : f32 to vector<4x128xf32>
    %80 = arith.subf %79, %65 : vector<4x128xf32>
    %81 = arith.mulf %80, %78 : vector<4x128xf32>
    %82 = arith.mulf %65, %45 : vector<4x128xf32>
    %83 = arith.addf %81, %82 : vector<4x128xf32>
    %c1_46 = arith.constant 1 : index
    %c0_47 = arith.constant 0 : index
    %c0_48 = arith.constant 0 : index
    %84 = vector.load %arg10[%c1_46, %c0_47, %c0_48] : memref<2x4x128xf32, #tpu.memory_space<vmem>>, vector<1x4x128xf32>
    %85 = vector.shape_cast %84 : vector<1x4x128xf32> to vector<4x128xf32>
    %86 = vector.shape_cast %83 : vector<4x128xf32> to vector<1x4x128xf32>
    tpu.vector_store %arg10[%c1_46, %c0_47, %c0_48], %86 {strides = array<i32>} : memref<2x4x128xf32, #tpu.memory_space<vmem>>, vector<1x4x128xf32>,
    %c0_49 = arith.constant 0 : index
    %c0_50 = arith.constant 0 : index
    %87 = vector.load %arg7[%c0_49, %c0_50] : memref<128x128xf32, #tpu.memory_space<vmem>>, vector<128x128xf32>
    %cst_51 = arith.constant dense<0.000000e+00> : vector<4x128xf32>
    %88 = tpu.matmul %83, %87, %cst_51 {dimension_numbers = #tpu.dot_dimension_numbers<[1], [0], [0], [1], [0, 0, 1, 1], [], []>} : vector<4x128xf32>, vector<128x128xf32>, vector<4x128xf32> -> vector<4x128xf32>
    %c0_52 = arith.constant 0 : index
    %c0_53 = arith.constant 0 : index
    %89 = vector.load %arg8[%c0_52, %c0_53] : memref<1x128xf32, #tpu.memory_space<vmem>>, vector<1x128xf32>
    %90 = vector.broadcast %89 : vector<1x128xf32> to vector<4x128xf32>
    %91 = arith.addf %88, %90 : vector<4x128xf32>
    %c0_54 = arith.constant 0 : index
    %c0_55 = arith.constant 0 : index
    %92 = vector.load %arg9[%c0_54, %c0_55] : memref<4x128xf32, #tpu.memory_space<vmem>>, vector<4x128xf32>
    tpu.vector_store %arg9[%c0_54, %c0_55], %91 {strides = array<i32>} : memref<4x128xf32, #tpu.memory_space<vmem>>, vector<4x128xf32>,
    return
  }
}

</mosaic_0001>

<llo_original>
// kernel: _decoder_step.1
$region0: #{_decoder_step.1}
  #allocation0 [shape = 'u32[]', space=smem, size = 0x4, offset = 0x4, fixed_abs, tag = 'smem constant byte address 0x4 - core index']
  #allocation1 [shape = 'u32[144,128]{1,0:T(1,128)}', space=vmem, size = 0x12000, scoped, tag = 'internal scratch']
  %s0 = inlined_call_operand.vmem [shape: f32[4,128], index: 0, kind: input, shape index: {}]
  %s1 = inlined_call_operand.vmem [shape: f32[2,4,128], index: 1, kind: input, shape index: {}]
  %s2 = inlined_call_operand.hbm [shape: f32[2,128,384], index: 2, kind: input, shape index: {}]
  %s3 = inlined_call_operand.hbm [shape: f32[2,128,384], index: 3, kind: input, shape index: {}]
  %s4 = inlined_call_operand.vmem [shape: f32[2,1,256], index: 4, kind: input, shape index: {}]
  %s5 = inlined_call_operand.vmem [shape: f32[2,1,128], index: 5, kind: input, shape index: {}]
  %s6 = inlined_call_operand.vmem [shape: f32[2,1,128], index: 6, kind: input, shape index: {}]
  %s7 = inlined_call_operand.hbm [shape: f32[128,128], index: 7, kind: input, shape index: {}]
  %s8 = inlined_call_operand.vmem [shape: f32[1,128], index: 8, kind: input, shape index: {}]
  %s9 = inlined_call_operand.hbm [shape: f32[4,128], index: 9, kind: output, shape index: {0}]
  %s10 = inlined_call_operand.hbm [shape: f32[2,4,128], index: 10, kind: output, shape index: {1}]
  %11 = xla_tuple %s9, %s10
  %s12 = sld [smem:[#allocation0]]
  $region66: #{_decoder_step.1} parent=0
    _
  %s14 = ssub.s32 1, %s12
  %s15 = scalar_select 0, %s14, %s12
  $region1: #{_decoder_step.1} parent=0
    #allocation2 [shape = 'u8[393216]{0}', space=vmem, size = 0x60000, scoped, tag = 'input window, operand 2, single buffered']
    #allocation3 [shape = 's32[1]{0}', space=sflag, size = 0x4, scoped, tag = 'scoped memory for _decoder_step.1']
    #allocation4 [shape = 's32[1]{0}', space=sflag, size = 0x4, scoped, tag = 'scoped memory for _decoder_step.1']
    #allocation5 [shape = 'u8[393216]{0}', space=vmem, size = 0x60000, scoped, tag = 'input window, operand 3, single buffered']
    #allocation6 [shape = 's32[1]{0}', space=sflag, size = 0x4, scoped, tag = 'scoped memory for _decoder_step.1']
    #allocation7 [shape = 'u8[65536]{0}', space=vmem, size = 0x10000, scoped, tag = 'input window, operand 7, single buffered']
    #allocation8 [shape = 'u8[2048]{0}', space=vmem, size = 0x800, scoped, tag = 'output window, operand 0, single buffered']
    #allocation9 [shape = 'u8[4096]{0}', space=vmem, size = 0x1000, scoped, tag = 'output window, operand 1, single buffered']
    #allocation10 [shape = 's32[1]{0}', space=sflag, size = 0x4, scoped, tag = 'scoped memory for _decoder_step.1']
    %16 = vsyncpa [#allocation3], 0
    %17 = vsyncpa [#allocation6], 0
    %18 = vsyncpa [#allocation4], 0
    %19 = vsyncpa [#allocation10], 0
    // Predicated region
    $region2: #{_decoder_step.1} parent=1 // pred_check
      _
    $region3: #{_decoder_step.1} parent=1 // pred_check_branch
      %21 = sbr.rel (0) target = $region5
    $region4: #{_decoder_step.1} parent=1 // pred_region
      _
    $region5: #{_decoder_step.1} parent=1 // pred_fallthru
      _
    // Predicated region
    $region6: #{_decoder_step.1} parent=1 // pred_check
      _
    $region7: #{_decoder_step.1} parent=1 // pred_check_branch
      %23 = sbr.rel (0) target = $region9
    $region8: #{_decoder_step.1} parent=1 // pred_region
      _
    $region9: #{_decoder_step.1} parent=1 // pred_fallthru
      _
    // Predicated region
    $region10: #{_decoder_step.1} parent=1 // pred_check
      _
    $region11: #{_decoder_step.1} parent=1 // pred_check_branch
      %25 = sbr.rel (0) target = $region13
    $region12: #{_decoder_step.1} parent=1 // pred_region
      %s27 = ssub.s32 12288, 12288
      %28 = vsyncadd [#allocation3], %s27
      %s29 = sshll.u32 [#allocation2], 4
      %s30 = int_to_ptr.vmem [resolvable:$true] %s29
      %35 = dma.hbm_to_vmem [thread:$0]  %s2, 12288, %s30, [#allocation3], 384, 384, 24
    $region13: #{_decoder_step.1} parent=1 // pred_fallthru
      _
    // Predicated region
    $region14: #{_decoder_step.1} parent=1 // pred_check
      _
    $region15: #{_decoder_step.1} parent=1 // pred_check_branch
      %37 = sbr.rel (0) target = $region17
    $region16: #{_decoder_step.1} parent=1 // pred_region
      %s39 = ssub.s32 12288, 12288
      %40 = vsyncadd [#allocation6], %s39
      %s41 = sshll.u32 [#allocation5], 4
      %s42 = int_to_ptr.vmem [resolvable:$true] %s41
      %47 = dma.hbm_to_vmem [thread:$0]  %s3, 12288, %s42, [#allocation6], 384, 384, 24
    $region17: #{_decoder_step.1} parent=1 // pred_fallthru
      _
    // Predicated region
    $region18: #{_decoder_step.1} parent=1 // pred_check
      _
    $region19: #{_decoder_step.1} parent=1 // pred_check_branch
      %49 = sbr.rel (0) target = $region21
    $region20: #{_decoder_step.1} parent=1 // pred_region
      _
    $region21: #{_decoder_step.1} parent=1 // pred_fallthru
      _
    // Predicated region
    $region22: #{_decoder_step.1} parent=1 // pred_check
      _
    $region23: #{_decoder_step.1} parent=1 // pred_check_branch
      %51 = sbr.rel (0) target = $region25
    $region24: #{_decoder_step.1} parent=1 // pred_region
      _
    $region25: #{_decoder_step.1} parent=1 // pred_fallthru
      _
    // Predicated region
    $region26: #{_decoder_step.1} parent=1 // pred_check
      _
    $region27: #{_decoder_step.1} parent=1 // pred_check_branch
      %53 = sbr.rel (0) target = $region29
    $region28: #{_decoder_step.1} parent=1 // pred_region
      _
    $region29: #{_decoder_step.1} parent=1 // pred_fallthru
      _
    // Predicated region
    $region30: #{_decoder_step.1} parent=1 // pred_check
      _
    $region31: #{_decoder_step.1} parent=1 // pred_check_branch
      %55 = sbr.rel (0) target = $region33
    $region32: #{_decoder_step.1} parent=1 // pred_region
      %s57 = ssub.s32 2048, 2048
      %58 = vsyncadd [#allocation6], %s57
      %s59 = sshll.u32 [#allocation7], 4
      %s60 = int_to_ptr.vmem [resolvable:$true] %s59
      %65 = dma.hbm_to_vmem [thread:$0]  %s7, 2048, %s60, [#allocation6], 128, 128, 8
    $region33: #{_decoder_step.1} parent=1 // pred_fallthru
      _
    // Predicated region
    $region34: #{_decoder_step.1} parent=1 // pred_check
      _
    $region35: #{_decoder_step.1} parent=1 // pred_check_branch
      %67 = sbr.rel (0) target = $region37
    $region36: #{_decoder_step.1} parent=1 // pred_region
      _
    $region37: #{_decoder_step.1} parent=1 // pred_fallthru
      _
    // Predicated region
    $region38: #{_decoder_step.1} parent=1 // pred_check
      _
    $region39: #{_decoder_step.1} parent=1 // pred_check_branch
      %69 = sbr.rel (0) target = $region41
    $region40: #{_decoder_step.1} parent=1 // pred_region
      %70 = dma.done [#allocation3], 12288
    $region41: #{_decoder_step.1} parent=1 // pred_fallthru
      _
    // Predicated region
    $region42: #{_decoder_step.1} parent=1 // pred_check
      _
    $region43: #{_decoder_step.1} parent=1 // pred_check_branch
      %72 = sbr.rel (0) target = $region45
    $region44: #{_decoder_step.1} parent=1 // pred_region
      %73 = dma.done [#allocation6], 12288
    $region45: #{_decoder_step.1} parent=1 // pred_fallthru
      _
    // Predicated region
    $region46: #{_decoder_step.1} parent=1 // pred_check
      _
    $region47: #{_decoder_step.1} parent=1 // pred_check_branch
      %75 = sbr.rel (0) target = $region49
    $region48: #{_decoder_step.1} parent=1 // pred_region
      %76 = dma.done [#allocation6], 2048
    $region49: #{_decoder_step.1} parent=1 // pred_fallthru
      _
    %v77 = vld [vmem:[%s0] sm:$0xf]
    %v78 = vld [vmem:[%s1] sm:$0xf]
    %v79 = vld [vmem:[#allocation2] sm:$0xff]
    %v80 = vld [vmem:[#allocation2 + $0x8] sm:$0xff]
    %v81 = vld [vmem:[#allocation2 + $0x10] sm:$0xff]
    %v82 = vld [vmem:[#allocation2 + $0x18] sm:$0xff]
    %v83 = vld [vmem:[#allocation2 + $0x20] sm:$0xff]
    %v84 = vld [vmem:[#allocation2 + $0x28] sm:$0xff]
    %v85 = vld [vmem:[#allocation2 + $0x30] sm:$0xff]
    %v86 = vld [vmem:[#allocation2 + $0x38] sm:$0xff]
    %v87 = vld [vmem:[#allocation2 + $0x40] sm:$0xff]
    %v88 = vld [vmem:[#allocation2 + $0x48] sm:$0xff]
    %v89 = vld [vmem:[#allocation2 + $0x50] sm:$0xff]
    %v90 = vld [vmem:[#allocation2 + $0x58] sm:$0xff]
    %v91 = vld [vmem:[#allocation2 + $0x60] sm:$0xff]
    %v92 = vld [vmem:[#allocation2 + $0x68] sm:$0xff]
    %v93 = vld [vmem:[#allocation2 + $0x70] sm:$0xff]
    %v94 = vld [vmem:[#allocation2 + $0x78] sm:$0xff]
    %v95 = vld [vmem:[#allocation2 + $0x80] sm:$0xff]
    %v96 = vld [vmem:[#allocation2 + $0x88] sm:$0xff]
    %v97 = vld [vmem:[#allocation2 + $0x90] sm:$0xff]
    %v98 = vld [vmem:[#allocation2 + $0x98] sm:$0xff]
    %v99 = vld [vmem:[#allocation2 + $0xa0] sm:$0xff]
    %v100 = vld [vmem:[#allocation2 + $0xa8] sm:$0xff]
    %v101 = vld [vmem:[#allocation2 + $0xb0] sm:$0xff]
    %v102 = vld [vmem:[#allocation2 + $0xb8] sm:$0xff]
    %v103 = vld [vmem:[#allocation2 + $0xc0] sm:$0xff]
    %v104 = vld [vmem:[#allocation2 + $0xc8] sm:$0xff]
    %v105 = vld [vmem:[#allocation2 + $0xd0] sm:$0xff]
    %v106 = vld [vmem:[#allocation2 + $0xd8] sm:$0xff]
    %v107 = vld [vmem:[#allocation2 + $0xe0] sm:$0xff]
    %v108 = vld [vmem:[#allocation2 + $0xe8] sm:$0xff]
    %v109 = vld [vmem:[#allocation2 + $0xf0] sm:$0xff]
    %v110 = vld [vmem:[#allocation2 + $0xf8] sm:$0xff]
    %v111 = vld [vmem:[#allocation2 + $0x100] sm:$0xff]
    %v112 = vld [vmem:[#allocation2 + $0x108] sm:$0xff]
    %v113 = vld [vmem:[#allocation2 + $0x110] sm:$0xff]
    %v114 = vld [vmem:[#allocation2 + $0x118] sm:$0xff]
    %v115 = vld [vmem:[#allocation2 + $0x120] sm:$0xff]
    %v116 = vld [vmem:[#allocation2 + $0x128] sm:$0xff]
    %v117 = vld [vmem:[#allocation2 + $0x130] sm:$0xff]
    %v118 = vld [vmem:[#allocation2 + $0x138] sm:$0xff]
    %v119 = vld [vmem:[#allocation2 + $0x140] sm:$0xff]
    %v120 = vld [vmem:[#allocation2 + $0x148] sm:$0xff]
    %v121 = vld [vmem:[#allocation2 + $0x150] sm:$0xff]
    %v122 = vld [vmem:[#allocation2 + $0x158] sm:$0xff]
    %v123 = vld [vmem:[#allocation2 + $0x160] sm:$0xff]
    %v124 = vld [vmem:[#allocation2 + $0x168] sm:$0xff]
    %v125 = vld [vmem:[#allocation2 + $0x170] sm:$0xff]
    %v126 = vld [vmem:[#allocation2 + $0x178] sm:$0xff]
    %127 = vmatprep.subr.mxu0 %v80
    %128 = vmatpush1.msra.mxu0 %v79
    %129 = vmatprep.subr.mxu0 %v83
    %130 = vmatpush1.msra.mxu0 %v82
    %131 = vmatprep.subr.mxu0 %v86
    %132 = vmatpush1.msra.mxu0 %v85
    %133 = vmatprep.subr.mxu0 %v89
    %134 = vmatpush1.msra.mxu0 %v88
    %135 = vmatprep.subr.mxu0 %v92
    %136 = vmatpush1.msra.mxu0 %v91
    %137 = vmatprep.subr.mxu0 %v95
    %138 = vmatpush1.msra.mxu0 %v94
    %139 = vmatprep.subr.mxu0 %v98
    %140 = vmatpush1.msra.mxu0 %v97
    %141 = vmatprep.subr.mxu0 %v101
    %142 = vmatpush1.msra.mxu0 %v100
    %143 = vmatprep.subr.mxu0 %v104
    %144 = vmatpush1.msra.mxu0 %v103
    %145 = vmatprep.subr.mxu0 %v107
    %146 = vmatpush1.msra.mxu0 %v106
    %147 = vmatprep.subr.mxu0 %v110
    %148 = vmatpush1.msra.mxu0 %v109
    %149 = vmatprep.subr.mxu0 %v113
    %150 = vmatpush1.msra.mxu0 %v112
    %151 = vmatprep.subr.mxu0 %v116
    %152 = vmatpush1.msra.mxu0 %v115
    %153 = vmatprep.subr.mxu0 %v119
    %154 = vmatpush1.msra.mxu0 %v118
    %155 = vmatprep.subr.mxu0 %v122
    %156 = vmatpush1.msra.mxu0 %v121
    %157 = vmatprep.subr.mxu0 %v125
    %158 = vmatpush1.msra.mxu0 %v124
    %159 = vmatprep.subr.mxu0 0.0
    %160 = vmatpush1.msra.mxu0 0.0
    %161 = vmatprep.subr.mxu0 0.0
    %162 = vmatpush1.msra.mxu0 0.0
    %163 = vmatprep.subr.mxu0 0.0
    %164 = vmatpush1.msra.mxu0 0.0
    %165 = vmatprep.subr.mxu0 0.0
    %166 = vmatpush1.msra.mxu0 0.0
    %167 = vmatprep.subr.mxu0 0.0
    %168 = vmatpush1.msra.mxu0 0.0
    %169 = vmatprep.subr.mxu0 0.0
    %170 = vmatpush1.msra.mxu0 0.0
    %171 = vmatprep.subr.mxu0 0.0
    %172 = vmatpush1.msra.mxu0 0.0
    %173 = vmatprep.subr.mxu0 0.0
    %174 = vmatpush1.msra.mxu0 0.0
    %175 = vmatprep.subr.mxu0 0.0
    %176 = vmatpush1.msra.mxu0 0.0
    %177 = vmatprep.subr.mxu0 0.0
    %178 = vmatpush1.msra.mxu0 0.0
    %179 = vmatprep.subr.mxu0 0.0
    %180 = vmatpush1.msra.mxu0 0.0
    %181 = vmatprep.subr.mxu0 0.0
    %182 = vmatpush1.msra.mxu0 0.0
    %183 = vmatprep.subr.mxu0 0.0
    %184 = vmatpush1.msra.mxu0 0.0
    %185 = vmatprep.subr.mxu0 0.0
    %186 = vmatpush1.msra.mxu0 0.0
    %187 = vmatprep.subr.mxu0 0.0
    %188 = vmatpush1.msra.mxu0 0.0
    %189 = vmatprep.subr.mxu0 0.0
    %190 = vmatpush1.msra.mxu0 0.0
    %191 = vmatprep.mubr.f32.mxu0 0.0
    %192 = vmatmul.mubr.f32.gmra.mrb[0].mxu0 %v77
    %v193 = vpop.f32.mrb[0].mxu0
    %v194 = vadd.f32 0.0, %v193
    %v195 = vpop.f32.mrb[0].mxu0
    %v196 = vadd.f32 0.0, %v195
    %197 = vdwg.mxu0
    %198 = vmatprep.subr.mxu0 0.0
    %199 = vmatpush1.msra.mxu0 %v81
    %200 = vmatprep.subr.mxu0 0.0
    %201 = vmatpush1.msra.mxu0 %v84
    %202 = vmatprep.subr.mxu0 0.0
    %203 = vmatpush1.msra.mxu0 %v87
    %204 = vmatprep.subr.mxu0 0.0
    %205 = vmatpush1.msra.mxu0 %v90
    %206 = vmatprep.subr.mxu0 0.0
    %207 = vmatpush1.msra.mxu0 %v93
    %208 = vmatprep.subr.mxu0 0.0
    %209 = vmatpush1.msra.mxu0 %v96
    %210 = vmatprep.subr.mxu0 0.0
    %211 = vmatpush1.msra.mxu0 %v99
    %212 = vmatprep.subr.mxu0 0.0
    %213 = vmatpush1.msra.mxu0 %v102
    %214 = vmatprep.subr.mxu0 0.0
    %215 = vmatpush1.msra.mxu0 %v105
    %216 = vmatprep.subr.mxu0 0.0
    %217 = vmatpush1.msra.mxu0 %v108
    %218 = vmatprep.subr.mxu0 0.0
    %219 = vmatpush1.msra.mxu0 %v111
    %220 = vmatprep.subr.mxu0 0.0
    %221 = vmatpush1.msra.mxu0 %v114
    %222 = vmatprep.subr.mxu0 0.0
    %223 = vmatpush1.msra.mxu0 %v117
    %224 = vmatprep.subr.mxu0 0.0
    %225 = vmatpush1.msra.mxu0 %v120
    %226 = vmatprep.subr.mxu0 0.0
    %227 = vmatpush1.msra.mxu0 %v123
    %228 = vmatprep.subr.mxu0 0.0
    %229 = vmatpush1.msra.mxu0 %v126
    %230 = vmatprep.subr.mxu0 0.0
    %231 = vmatpush1.msra.mxu0 0.0
    %232 = vmatprep.subr.mxu0 0.0
    %233 = vmatpush1.msra.mxu0 0.0
    %234 = vmatprep.subr.mxu0 0.0
    %235 = vmatpush1.msra.mxu0 0.0
    %236 = vmatprep.subr.mxu0 0.0
    %237 = vmatpush1.msra.mxu0 0.0
    %238 = vmatprep.subr.mxu0 0.0
    %239 = vmatpush1.msra.mxu0 0.0
    %240 = vmatprep.subr.mxu0 0.0
    %241 = vmatpush1.msra.mxu0 0.0
    %242 = vmatprep.subr.mxu0 0.0
    %243 = vmatpush1.msra.mxu0 0.0
    %244 = vmatprep.subr.mxu0 0.0
    %245 = vmatpush1.msra.mxu0 0.0
    %246 = vmatprep.subr.mxu0 0.0
    %247 = vmatpush1.msra.mxu0 0.0
    %248 = vmatprep.subr.mxu0 0.0
    %249 = vmatpush1.msra.mxu0 0.0
    %250 = vmatprep.subr.mxu0 0.0
    %251 = vmatpush1.msra.mxu0 0.0
    %252 = vmatprep.subr.mxu0 0.0
    %253 = vmatpush1.msra.mxu0 0.0
    %254 = vmatprep.subr.mxu0 0.0
    %255 = vmatpush1.msra.mxu0 0.0
    %256 = vmatprep.subr.mxu0 0.0
    %257 = vmatpush1.msra.mxu0 0.0
    %258 = vmatprep.subr.mxu0 0.0
    %259 = vmatpush1.msra.mxu0 0.0
    %260 = vmatprep.subr.mxu0 0.0
    %261 = vmatpush1.msra.mxu0 0.0
    %262 = vmatprep.mubr.f32.mxu0 0.0
    %263 = vmatmul.mubr.f32.gmra.mrb[0].mxu0 %v77
    %v264 = vpop.f32.mrb[0].mxu0
    %v265 = vadd.f32 0.0, %v264
    %v266 = vpop.f32.mrb[0].mxu0
    %267 = vdwg.mxu0
    %v268 = vld [vmem:[#allocation5] sm:$0xff]
    %v269 = vld [vmem:[#allocation5 + $0x8] sm:$0xff]
    %v270 = vld [vmem:[#allocation5 + $0x10] sm:$0xff]
    %v271 = vld [vmem:[#allocation5 + $0x18] sm:$0xff]
    %v272 = vld [vmem:[#allocation5 + $0x20] sm:$0xff]
    %v273 = vld [vmem:[#allocation5 + $0x28] sm:$0xff]
    %v274 = vld [vmem:[#allocation5 + $0x30] sm:$0xff]
    %v275 = vld [vmem:[#allocation5 + $0x38] sm:$0xff]
    %v276 = vld [vmem:[#allocation5 + $0x40] sm:$0xff]
    %v277 = vld [vmem:[#allocation5 + $0x48] sm:$0xff]
    %v278 = vld [vmem:[#allocation5 + $0x50] sm:$0xff]
    %v279 = vld [vmem:[#allocation5 + $0x58] sm:$0xff]
    %v280 = vld [vmem:[#allocation5 + $0x60] sm:$0xff]
    %v281 = vld [vmem:[#allocation5 + $0x68] sm:$0xff]
    %v282 = vld [vmem:[#allocation5 + $0x70] sm:$0xff]
    %v283 = vld [vmem:[#allocation5 + $0x78] sm:$0xff]
    %v284 = vld [vmem:[#allocation5 + $0x80] sm:$0xff]
    %v285 = vld [vmem:[#allocation5 + $0x88] sm:$0xff]
    %v286 = vld [vmem:[#allocation5 + $0x90] sm:$0xff]
    %v287 = vld [vmem:[#allocation5 + $0x98] sm:$0xff]
    %v288 = vld [vmem:[#allocation5 + $0xa0] sm:$0xff]
    %v289 = vld [vmem:[#allocation5 + $0xa8] sm:$0xff]
    %v290 = vld [vmem:[#allocation5 + $0xb0] sm:$0xff]
    %v291 = vld [vmem:[#allocation5 + $0xb8] sm:$0xff]
    %v292 = vld [vmem:[#allocation5 + $0xc0] sm:$0xff]
    %v293 = vld [vmem:[#allocation5 + $0xc8] sm:$0xff]
    %v294 = vld [vmem:[#allocation5 + $0xd0] sm:$0xff]
    %v295 = vld [vmem:[#allocation5 + $0xd8] sm:$0xff]
    %v296 = vld [vmem:[#allocation5 + $0xe0] sm:$0xff]
    %v297 = vld [vmem:[#allocation5 + $0xe8] sm:$0xff]
    %v298 = vld [vmem:[#allocation5 + $0xf0] sm:$0xff]
    %v299 = vld [vmem:[#allocation5 + $0xf8] sm:$0xff]
    %v300 = vld [vmem:[#allocation5 + $0x100] sm:$0xff]
    %v301 = vld [vmem:[#allocation5 + $0x108] sm:$0xff]
    %v302 = vld [vmem:[#allocation5 + $0x110] sm:$0xff]
    %v303 = vld [vmem:[#allocation5 + $0x118] sm:$0xff]
    %v304 = vld [vmem:[#allocation5 + $0x120] sm:$0xff]
    %v305 = vld [vmem:[#allocation5 + $0x128] sm:$0xff]
    %v306 = vld [vmem:[#allocation5 + $0x130] sm:$0xff]
    %v307 = vld [vmem:[#allocation5 + $0x138] sm:$0xff]
    %v308 = vld [vmem:[#allocation5 + $0x140] sm:$0xff]
    %v309 = vld [vmem:[#allocation5 + $0x148] sm:$0xff]
    %v310 = vld [vmem:[#allocation5 + $0x150] sm:$0xff]
    %v311 = vld [vmem:[#allocation5 + $0x158] sm:$0xff]
    %v312 = vld [vmem:[#allocation5 + $0x160] sm:$0xff]
    %v313 = vld [vmem:[#allocation5 + $0x168] sm:$0xff]
    %v314 = vld [vmem:[#allocation5 + $0x170] sm:$0xff]
    %v315 = vld [vmem:[#allocation5 + $0x178] sm:$0xff]
    %316 = vmatprep.subr.mxu0 %v269
    %317 = vmatpush1.msra.mxu0 %v268
    %318 = vmatprep.subr.mxu0 %v272
    %319 = vmatpush1.msra.mxu0 %v271
    %320 = vmatprep.subr.mxu0 %v275
    %321 = vmatpush1.msra.mxu0 %v274
    %322 = vmatprep.subr.mxu0 %v278
    %323 = vmatpush1.msra.mxu0 %v277
    %324 = vmatprep.subr.mxu0 %v281
    %325 = vmatpush1.msra.mxu0 %v280
    %326 = vmatprep.subr.mxu0 %v284
    %327 = vmatpush1.msra.mxu0 %v283
    %328 = vmatprep.subr.mxu0 %v287
    %329 = vmatpush1.msra.mxu0 %v286
    %330 = vmatprep.subr.mxu0 %v290
    %331 = vmatpush1.msra.mxu0 %v289
    %332 = vmatprep.subr.mxu0 %v293
    %333 = vmatpush1.msra.mxu0 %v292
    %334 = vmatprep.subr.mxu0 %v296
    %335 = vmatpush1.msra.mxu0 %v295
    %336 = vmatprep.subr.mxu0 %v299
    %337 = vmatpush1.msra.mxu0 %v298
    %338 = vmatprep.subr.mxu0 %v302
    %339 = vmatpush1.msra.mxu0 %v301
    %340 = vmatprep.subr.mxu0 %v305
    %341 = vmatpush1.msra.mxu0 %v304
    %342 = vmatprep.subr.mxu0 %v308
    %343 = vmatpush1.msra.mxu0 %v307
    %344 = vmatprep.subr.mxu0 %v311
    %345 = vmatpush1.msra.mxu0 %v310
    %346 = vmatprep.subr.mxu0 %v314
    %347 = vmatpush1.msra.mxu0 %v313
    %348 = vmatprep.subr.mxu0 0.0
    %349 = vmatpush1.msra.mxu0 0.0
    %350 = vmatprep.subr.mxu0 0.0
    %351 = vmatpush1.msra.mxu0 0.0
    %352 = vmatprep.subr.mxu0 0.0
    %353 = vmatpush1.msra.mxu0 0.0
    %354 = vmatprep.subr.mxu0 0.0
    %355 = vmatpush1.msra.mxu0 0.0
    %356 = vmatprep.subr.mxu0 0.0
    %357 = vmatpush1.msra.mxu0 0.0
    %358 = vmatprep.subr.mxu0 0.0
    %359 = vmatpush1.msra.mxu0 0.0
    %360 = vmatprep.subr.mxu0 0.0
    %361 = vmatpush1.msra.mxu0 0.0
    %362 = vmatprep.subr.mxu0 0.0
    %363 = vmatpush1.msra.mxu0 0.0
    %364 = vmatprep.subr.mxu0 0.0
    %365 = vmatpush1.msra.mxu0 0.0
    %366 = vmatprep.subr.mxu0 0.0
    %367 = vmatpush1.msra.mxu0 0.0
    %368 = vmatprep.subr.mxu0 0.0
    %369 = vmatpush1.msra.mxu0 0.0
    %370 = vmatprep.subr.mxu0 0.0
    %371 = vmatpush1.msra.mxu0 0.0
    %372 = vmatprep.subr.mxu0 0.0
    %373 = vmatpush1.msra.mxu0 0.0
    %374 = vmatprep.subr.mxu0 0.0
    %375 = vmatpush1.msra.mxu0 0.0
    %376 = vmatprep.subr.mxu0 0.0
    %377 = vmatpush1.msra.mxu0 0.0
    %378 = vmatprep.subr.mxu0 0.0
    %379 = vmatpush1.msra.mxu0 0.0
    %380 = vmatprep.mubr.f32.mxu0 0.0
    %381 = vmatmul.mubr.f32.gmra.mrb[0].mxu0 %v78
    %v382 = vpop.f32.mrb[0].mxu0
    %v383 = vadd.f32 0.0, %v382
    %v384 = vpop.f32.mrb[0].mxu0
    %v385 = vadd.f32 0.0, %v384
    %386 = vdwg.mxu0
    %387 = vmatprep.subr.mxu0 0.0
    %388 = vmatpush1.msra.mxu0 %v270
    %389 = vmatprep.subr.mxu0 0.0
    %390 = vmatpush1.msra.mxu0 %v273
    %391 = vmatprep.subr.mxu0 0.0
    %392 = vmatpush1.msra.mxu0 %v276
    %393 = vmatprep.subr.mxu0 0.0
    %394 = vmatpush1.msra.mxu0 %v279
    %395 = vmatprep.subr.mxu0 0.0
    %396 = vmatpush1.msra.mxu0 %v282
    %397 = vmatprep.subr.mxu0 0.0
    %398 = vmatpush1.msra.mxu0 %v285
    %399 = vmatprep.subr.mxu0 0.0
    %400 = vmatpush1.msra.mxu0 %v288
    %401 = vmatprep.subr.mxu0 0.0
    %402 = vmatpush1.msra.mxu0 %v291
    %403 = vmatprep.subr.mxu0 0.0
    %404 = vmatpush1.msra.mxu0 %v294
    %405 = vmatprep.subr.mxu0 0.0
    %406 = vmatpush1.msra.mxu0 %v297
    %407 = vmatprep.subr.mxu0 0.0
    %408 = vmatpush1.msra.mxu0 %v300
    %409 = vmatprep.subr.mxu0 0.0
    %410 = vmatpush1.msra.mxu0 %v303
    %411 = vmatprep.subr.mxu0 0.0
    %412 = vmatpush1.msra.mxu0 %v306
    %413 = vmatprep.subr.mxu0 0.0
    %414 = vmatpush1.msra.mxu0 %v309
    %415 = vmatprep.subr.mxu0 0.0
    %416 = vmatpush1.msra.mxu0 %v312
    %417 = vmatprep.subr.mxu0 0.0
    %418 = vmatpush1.msra.mxu0 %v315
    %419 = vmatprep.subr.mxu0 0.0
    %420 = vmatpush1.msra.mxu0 0.0
    %421 = vmatprep.subr.mxu0 0.0
    %422 = vmatpush1.msra.mxu0 0.0
    %423 = vmatprep.subr.mxu0 0.0
    %424 = vmatpush1.msra.mxu0 0.0
    %425 = vmatprep.subr.mxu0 0.0
    %426 = vmatpush1.msra.mxu0 0.0
    %427 = vmatprep.subr.mxu0 0.0
    %428 = vmatpush1.msra.mxu0 0.0
    %429 = vmatprep.subr.mxu0 0.0
    %430 = vmatpush1.msra.mxu0 0.0
    %431 = vmatprep.subr.mxu0 0.0
    %432 = vmatpush1.msra.mxu0 0.0
    %433 = vmatprep.subr.mxu0 0.0
    %434 = vmatpush1.msra.mxu0 0.0
    %435 = vmatprep.subr.mxu0 0.0
    %436 = vmatpush1.msra.mxu0 0.0
    %437 = vmatprep.subr.mxu0 0.0
    %438 = vmatpush1.msra.mxu0 0.0
    %439 = vmatprep.subr.mxu0 0.0
    %440 = vmatpush1.msra.mxu0 0.0
    %441 = vmatprep.subr.mxu0 0.0
    %442 = vmatpush1.msra.mxu0 0.0
    %443 = vmatprep.subr.mxu0 0.0
    %444 = vmatpush1.msra.mxu0 0.0
    %445 = vmatprep.subr.mxu0 0.0
    %446 = vmatpush1.msra.mxu0 0.0
    %447 = vmatprep.subr.mxu0 0.0
    %448 = vmatpush1.msra.mxu0 0.0
    %449 = vmatprep.subr.mxu0 0.0
    %450 = vmatpush1.msra.mxu0 0.0
    %451 = vmatprep.mubr.f32.mxu0 0.0
    %452 = vmatmul.mubr.f32.gmra.mrb[0].mxu0 %v78
    %v453 = vpop.f32.mrb[0].mxu0
    %v454 = vadd.f32 0.0, %v453
    %v455 = vpop.f32.mrb[0].mxu0
    %456 = vdwg.mxu0
    %v457 = vadd.f32 %v194, %v383
    %v458 = vadd.f32 %v196, %v385
    %v459 = vld [vmem:[%s4] sm:$0x3]
    %v461 = vlaneseq
    %v462 = vshrl.u32 %v461, 7
    %v463 = vsub.s32 0, %v462
    %v464 = vrot.slane %v459, %v463
    %v465 = vlaneseq
    %v466 = vshrl.u32 %v465, 7
    %v467 = vsub.s32 1, %v466
    %v468 = vrot.slane %v459, %v467
    %v471 = vadd.f32 %v457, %v464
    %v472 = vadd.f32 %v458, %v468
    %v473 = vxor.u32 %v471, 2147483648
    %v474 = vxor.u32 %v472, 2147483648
    %v475 = vmul.f32 %v473, 1.442695
    %v476 = vpow.pop %v475
    %v477 = vmul.f32 %v474, 1.442695
    %v478 = vpow.pop %v477
    %v479 = vadd.f32 %v476, 1.0
    %v480 = vadd.f32 %v478, 1.0
    %v481 = vrcp.pop %v479
    %v482 = vmul.f32 1.0, %v481
    %v483 = vrcp.pop %v480
    %v484 = vmul.f32 1.0, %v483
    %v485 = vld [vmem:[%s5] sm:$0x1]
    %v487 = vlaneseq
    %v488 = vshrl.u32 %v487, 7
    %v489 = vsub.s32 0, %v488
    %v490 = vrot.slane %v485, %v489
    %v492 = vadd.f32 %v265, %v490
    %v493 = vld [vmem:[%s6] sm:$0x1]
    %v495 = vlaneseq
    %v496 = vshrl.u32 %v495, 7
    %v497 = vsub.s32 0, %v496
    %v498 = vrot.slane %v493, %v497
    %v500 = vadd.f32 %v454, %v498
    %v501 = vmul.f32 %v482, %v500
    %v502 = vadd.f32 %v492, %v501
    %v503 = vtanh.pop %v502
    %v504 = vsub.f32 1.0, %v484
    %v505 = vmul.f32 %v504, %v503
    %v506 = vmul.f32 %v484, %v78
    %v507 = vadd.f32 %v505, %v506
    %508 = vst [vmem:[#allocation9] sm:$0xf] %v507
    %s509 = scalar_lea.vmem %s1, 4
    %v510 = vld [vmem:[%s509] sm:$0xf]
    %s511 = scalar_lea.vmem [#allocation2], 384
    %v512 = vld [vmem:[%s511] sm:$0xff]
    %v513 = vld [vmem:[%s511 + $0x8] sm:$0xff]
    %v514 = vld [vmem:[%s511 + $0x10] sm:$0xff]
    %v515 = vld [vmem:[%s511 + $0x18] sm:$0xff]
    %v516 = vld [vmem:[%s511 + $0x20] sm:$0xff]
    %v517 = vld [vmem:[%s511 + $0x28] sm:$0xff]
    %v518 = vld [vmem:[%s511 + $0x30] sm:$0xff]
    %v519 = vld [vmem:[%s511 + $0x38] sm:$0xff]
    %v520 = vld [vmem:[%s511 + $0x40] sm:$0xff]
    %v521 = vld [vmem:[%s511 + $0x48] sm:$0xff]
    %v522 = vld [vmem:[%s511 + $0x50] sm:$0xff]
    %v523 = vld [vmem:[%s511 + $0x58] sm:$0xff]
    %v524 = vld [vmem:[%s511 + $0x60] sm:$0xff]
    %v525 = vld [vmem:[%s511 + $0x68] sm:$0xff]
    %v526 = vld [vmem:[%s511 + $0x70] sm:$0xff]
    %v527 = vld [vmem:[%s511 + $0x78] sm:$0xff]
    %v528 = vld [vmem:[%s511 + $0x80] sm:$0xff]
    %v529 = vld [vmem:[%s511 + $0x88] sm:$0xff]
    %v530 = vld [vmem:[%s511 + $0x90] sm:$0xff]
    %v531 = vld [vmem:[%s511 + $0x98] sm:$0xff]
    %v532 = vld [vmem:[%s511 + $0xa0] sm:$0xff]
    %v533 = vld [vmem:[%s511 + $0xa8] sm:$0xff]
    %v534 = vld [vmem:[%s511 + $0xb0] sm:$0xff]
    %v535 = vld [vmem:[%s511 + $0xb8] sm:$0xff]
    %v536 = vld [vmem:[%s511 + $0xc0] sm:$0xff]
    %v537 = vld [vmem:[%s511 + $0xc8] sm:$0xff]
    %v538 = vld [vmem:[%s511 + $0xd0] sm:$0xff]
    %v539 = vld [vmem:[%s511 + $0xd8] sm:$0xff]
    %v540 = vld [vmem:[%s511 + $0xe0] sm:$0xff]
    %v541 = vld [vmem:[%s511 + $0xe8] sm:$0xff]
    %v542 = vld [vmem:[%s511 + $0xf0] sm:$0xff]
    %v543 = vld [vmem:[%s511 + $0xf8] sm:$0xff]
    %v544 = vld [vmem:[%s511 + $0x100] sm:$0xff]
    %v545 = vld [vmem:[%s511 + $0x108] sm:$0xff]
    %v546 = vld [vmem:[%s511 + $0x110] sm:$0xff]
    %v547 = vld [vmem:[%s511 + $0x118] sm:$0xff]
    %v548 = vld [vmem:[%s511 + $0x120] sm:$0xff]
    %v549 = vld [vmem:[%s511 + $0x128] sm:$0xff]
    %v550 = vld [vmem:[%s511 + $0x130] sm:$0xff]
    %v551 = vld [vmem:[%s511 + $0x138] sm:$0xff]
    %v552 = vld [vmem:[%s511 + $0x140] sm:$0xff]
    %v553 = vld [vmem:[%s511 + $0x148] sm:$0xff]
    %v554 = vld [vmem:[%s511 + $0x150] sm:$0xff]
    %v555 = vld [vmem:[%s511 + $0x158] sm:$0xff]
    %v556 = vld [vmem:[%s511 + $0x160] sm:$0xff]
    %v557 = vld [vmem:[%s511 + $0x168] sm:$0xff]
    %v558 = vld [vmem:[%s511 + $0x170] sm:$0xff]
    %v559 = vld [vmem:[%s511 + $0x178] sm:$0xff]
    %560 = vmatprep.subr.mxu0 %v513
    %561 = vmatpush1.msra.mxu0 %v512
    %562 = vmatprep.subr.mxu0 %v516
    %563 = vmatpush1.msra.mxu0 %v515
    %564 = vmatprep.subr.mxu0 %v519
    %565 = vmatpush1.msra.mxu0 %v518
    %566 = vmatprep.subr.mxu0 %v522
    %567 = vmatpush1.msra.mxu0 %v521
    %568 = vmatprep.subr.mxu0 %v525
    %569 = vmatpush1.msra.mxu0 %v524
    %570 = vmatprep.subr.mxu0 %v528
    %571 = vmatpush1.msra.mxu0 %v527
    %572 = vmatprep.subr.mxu0 %v531
    %573 = vmatpush1.msra.mxu0 %v530
    %574 = vmatprep.subr.mxu0 %v534
    %575 = vmatpush1.msra.mxu0 %v533
    %576 = vmatprep.subr.mxu0 %v537
    %577 = vmatpush1.msra.mxu0 %v536
    %578 = vmatprep.subr.mxu0 %v540
    %579 = vmatpush1.msra.mxu0 %v539
    %580 = vmatprep.subr.mxu0 %v543
    %581 = vmatpush1.msra.mxu0 %v542
    %582 = vmatprep.subr.mxu0 %v546
    %583 = vmatpush1.msra.mxu0 %v545
    %584 = vmatprep.subr.mxu0 %v549
    %585 = vmatpush1.msra.mxu0 %v548
    %586 = vmatprep.subr.mxu0 %v552
    %587 = vmatpush1.msra.mxu0 %v551
    %588 = vmatprep.subr.mxu0 %v555
    %589 = vmatpush1.msra.mxu0 %v554
    %590 = vmatprep.subr.mxu0 %v558
    %591 = vmatpush1.msra.mxu0 %v557
    %592 = vmatprep.subr.mxu0 0.0
    %593 = vmatpush1.msra.mxu0 0.0
    %594 = vmatprep.subr.mxu0 0.0
    %595 = vmatpush1.msra.mxu0 0.0
    %596 = vmatprep.subr.mxu0 0.0
    %597 = vmatpush1.msra.mxu0 0.0
    %598 = vmatprep.subr.mxu0 0.0
    %599 = vmatpush1.msra.mxu0 0.0
    %600 = vmatprep.subr.mxu0 0.0
    %601 = vmatpush1.msra.mxu0 0.0
    %602 = vmatprep.subr.mxu0 0.0
    %603 = vmatpush1.msra.mxu0 0.0
    %604 = vmatprep.subr.mxu0 0.0
    %605 = vmatpush1.msra.mxu0 0.0
    %606 = vmatprep.subr.mxu0 0.0
    %607 = vmatpush1.msra.mxu0 0.0
    %608 = vmatprep.subr.mxu0 0.0
    %609 = vmatpush1.msra.mxu0 0.0
    %610 = vmatprep.subr.mxu0 0.0
    %611 = vmatpush1.msra.mxu0 0.0
    %612 = vmatprep.subr.mxu0 0.0
    %613 = vmatpush1.msra.mxu0 0.0
    %614 = vmatprep.subr.mxu0 0.0
    %615 = vmatpush1.msra.mxu0 0.0
    %616 = vmatprep.subr.mxu0 0.0
    %617 = vmatpush1.msra.mxu0 0.0
    %618 = vmatprep.subr.mxu0 0.0
    %619 = vmatpush1.msra.mxu0 0.0
    %620 = vmatprep.subr.mxu0 0.0
    %621 = vmatpush1.msra.mxu0 0.0
    %622 = vmatprep.subr.mxu0 0.0
    %623 = vmatpush1.msra.mxu0 0.0
    %624 = vmatprep.mubr.f32.mxu0 0.0
    %625 = vmatmul.mubr.f32.gmra.mrb[0].mxu0 %v507
    %v626 = vpop.f32.mrb[0].mxu0
    %v627 = vadd.f32 0.0, %v626
    %v628 = vpop.f32.mrb[0].mxu0
    %v629 = vadd.f32 0.0, %v628
    %630 = vdwg.mxu0
    %631 = vmatprep.subr.mxu0 0.0
    %632 = vmatpush1.msra.mxu0 %v514
    %633 = vmatprep.subr.mxu0 0.0
    %634 = vmatpush1.msra.mxu0 %v517
    %635 = vmatprep.subr.mxu0 0.0
    %636 = vmatpush1.msra.mxu0 %v520
    %637 = vmatprep.subr.mxu0 0.0
    %638 = vmatpush1.msra.mxu0 %v523
    %639 = vmatprep.subr.mxu0 0.0
    %640 = vmatpush1.msra.mxu0 %v526
    %641 = vmatprep.subr.mxu0 0.0
    %642 = vmatpush1.msra.mxu0 %v529
    %643 = vmatprep.subr.mxu0 0.0
    %644 = vmatpush1.msra.mxu0 %v532
    %645 = vmatprep.subr.mxu0 0.0
    %646 = vmatpush1.msra.mxu0 %v535
    %647 = vmatprep.subr.mxu0 0.0
    %648 = vmatpush1.msra.mxu0 %v538
    %649 = vmatprep.subr.mxu0 0.0
    %650 = vmatpush1.msra.mxu0 %v541
    %651 = vmatprep.subr.mxu0 0.0
    %652 = vmatpush1.msra.mxu0 %v544
    %653 = vmatprep.subr.mxu0 0.0
    %654 = vmatpush1.msra.mxu0 %v547
    %655 = vmatprep.subr.mxu0 0.0
    %656 = vmatpush1.msra.mxu0 %v550
    %657 = vmatprep.subr.mxu0 0.0
    %658 = vmatpush1.msra.mxu0 %v553
    %659 = vmatprep.subr.mxu0 0.0
    %660 = vmatpush1.msra.mxu0 %v556
    %661 = vmatprep.subr.mxu0 0.0
    %662 = vmatpush1.msra.mxu0 %v559
    %663 = vmatprep.subr.mxu0 0.0
    %664 = vmatpush1.msra.mxu0 0.0
    %665 = vmatprep.subr.mxu0 0.0
    %666 = vmatpush1.msra.mxu0 0.0
    %667 = vmatprep.subr.mxu0 0.0
    %668 = vmatpush1.msra.mxu0 0.0
    %669 = vmatprep.subr.mxu0 0.0
    %670 = vmatpush1.msra.mxu0 0.0
    %671 = vmatprep.subr.mxu0 0.0
    %672 = vmatpush1.msra.mxu0 0.0
    %673 = vmatprep.subr.mxu0 0.0
    %674 = vmatpush1.msra.mxu0 0.0
    %675 = vmatprep.subr.mxu0 0.0
    %676 = vmatpush1.msra.mxu0 0.0
    %677 = vmatprep.subr.mxu0 0.0
    %678 = vmatpush1.msra.mxu0 0.0
    %679 = vmatprep.subr.mxu0 0.0
    %680 = vmatpush1.msra.mxu0 0.0
    %681 = vmatprep.subr.mxu0 0.0
    %682 = vmatpush1.msra.mxu0 0.0
    %683 = vmatprep.subr.mxu0 0.0
    %684 = vmatpush1.msra.mxu0 0.0
    %685 = vmatprep.subr.mxu0 0.0
    %686 = vmatpush1.msra.mxu0 0.0
    %687 = vmatprep.subr.mxu0 0.0
    %688 = vmatpush1.msra.mxu0 0.0
    %689 = vmatprep.subr.mxu0 0.0
    %690 = vmatpush1.msra.mxu0 0.0
    %691 = vmatprep.subr.mxu0 0.0
    %692 = vmatpush1.msra.mxu0 0.0
    %693 = vmatprep.subr.mxu0 0.0
    %694 = vmatpush1.msra.mxu0 0.0
    %695 = vmatprep.mubr.f32.mxu0 0.0
    %696 = vmatmul.mubr.f32.gmra.mrb[0].mxu0 %v507
    %v697 = vpop.f32.mrb[0].mxu0
    %v698 = vadd.f32 0.0, %v697
    %v699 = vpop.f32.mrb[0].mxu0
    %700 = vdwg.mxu0
    %s701 = scalar_lea.vmem [#allocation5], 384
    %v702 = vld [vmem:[%s701] sm:$0xff]
    %v703 = vld [vmem:[%s701 + $0x8] sm:$0xff]
    %v704 = vld [vmem:[%s701 + $0x10] sm:$0xff]
    %v705 = vld [vmem:[%s701 + $0x18] sm:$0xff]
    %v706 = vld [vmem:[%s701 + $0x20] sm:$0xff]
    %v707 = vld [vmem:[%s701 + $0x28] sm:$0xff]
    %v708 = vld [vmem:[%s701 + $0x30] sm:$0xff]
    %v709 = vld [vmem:[%s701 + $0x38] sm:$0xff]
    %v710 = vld [vmem:[%s701 + $0x40] sm:$0xff]
    %v711 = vld [vmem:[%s701 + $0x48] sm:$0xff]
    %v712 = vld [vmem:[%s701 + $0x50] sm:$0xff]
    %v713 = vld [vmem:[%s701 + $0x58] sm:$0xff]
    %v714 = vld [vmem:[%s701 + $0x60] sm:$0xff]
    %v715 = vld [vmem:[%s701 + $0x68] sm:$0xff]
    %v716 = vld [vmem:[%s701 + $0x70] sm:$0xff]
    %v717 = vld [vmem:[%s701 + $0x78] sm:$0xff]
    %v718 = vld [vmem:[%s701 + $0x80] sm:$0xff]
    %v719 = vld [vmem:[%s701 + $0x88] sm:$0xff]
    %v720 = vld [vmem:[%s701 + $0x90] sm:$0xff]
    %v721 = vld [vmem:[%s701 + $0x98] sm:$0xff]
    %v722 = vld [vmem:[%s701 + $0xa0] sm:$0xff]
    %v723 = vld [vmem:[%s701 + $0xa8] sm:$0xff]
    %v724 = vld [vmem:[%s701 + $0xb0] sm:$0xff]
    %v725 = vld [vmem:[%s701 + $0xb8] sm:$0xff]
    %v726 = vld [vmem:[%s701 + $0xc0] sm:$0xff]
    %v727 = vld [vmem:[%s701 + $0xc8] sm:$0xff]
    %v728 = vld [vmem:[%s701 + $0xd0] sm:$0xff]
    %v729 = vld [vmem:[%s701 + $0xd8] sm:$0xff]
    %v730 = vld [vmem:[%s701 + $0xe0] sm:$0xff]
    %v731 = vld [vmem:[%s701 + $0xe8] sm:$0xff]
    %v732 = vld [vmem:[%s701 + $0xf0] sm:$0xff]
    %v733 = vld [vmem:[%s701 + $0xf8] sm:$0xff]
    %v734 = vld [vmem:[%s701 + $0x100] sm:$0xff]
    %v735 = vld [vmem:[%s701 + $0x108] sm:$0xff]
    %v736 = vld [vmem:[%s701 + $0x110] sm:$0xff]
    %v737 = vld [vmem:[%s701 + $0x118] sm:$0xff]
    %v738 = vld [vmem:[%s701 + $0x120] sm:$0xff]
    %v739 = vld [vmem:[%s701 + $0x128] sm:$0xff]
    %v740 = vld [vmem:[%s701 + $0x130] sm:$0xff]
    %v741 = vld [vmem:[%s701 + $0x138] sm:$0xff]
    %v742 = vld [vmem:[%s701 + $0x140] sm:$0xff]
    %v743 = vld [vmem:[%s701 + $0x148] sm:$0xff]
    %v744 = vld [vmem:[%s701 + $0x150] sm:$0xff]
    %v745 = vld [vmem:[%s701 + $0x158] sm:$0xff]
    %v746 = vld [vmem:[%s701 + $0x160] sm:$0xff]
    %v747 = vld [vmem:[%s701 + $0x168] sm:$0xff]
    %v748 = vld [vmem:[%s701 + $0x170] sm:$0xff]
    %v749 = vld [vmem:[%s701 + $0x178] sm:$0xff]
    %750 = vmatprep.subr.mxu0 %v703
    %751 = vmatpush1.msra.mxu0 %v702
    %752 = vmatprep.subr.mxu0 %v706
    %753 = vmatpush1.msra.mxu0 %v705
    %754 = vmatprep.subr.mxu0 %v709
    %755 = vmatpush1.msra.mxu0 %v708
    %756 = vmatprep.subr.mxu0 %v712
    %757 = vmatpush1.msra.mxu0 %v711
    %758 = vmatprep.subr.mxu0 %v715
    %759 = vmatpush1.msra.mxu0 %v714
    %760 = vmatprep.subr.mxu0 %v718
    %761 = vmatpush1.msra.mxu0 %v717
    %762 = vmatprep.subr.mxu0 %v721
    %763 = vmatpush1.msra.mxu0 %v720
    %764 = vmatprep.subr.mxu0 %v724
    %765 = vmatpush1.msra.mxu0 %v723
    %766 = vmatprep.subr.mxu0 %v727
    %767 = vmatpush1.msra.mxu0 %v726
    %768 = vmatprep.subr.mxu0 %v730
    %769 = vmatpush1.msra.mxu0 %v729
    %770 = vmatprep.subr.mxu0 %v733
    %771 = vmatpush1.msra.mxu0 %v732
    %772 = vmatprep.subr.mxu0 %v736
    %773 = vmatpush1.msra.mxu0 %v735
    %774 = vmatprep.subr.mxu0 %v739
    %775 = vmatpush1.msra.mxu0 %v738
    %776 = vmatprep.subr.mxu0 %v742
    %777 = vmatpush1.msra.mxu0 %v741
    %778 = vmatprep.subr.mxu0 %v745
    %779 = vmatpush1.msra.mxu0 %v744
    %780 = vmatprep.subr.mxu0 %v748
    %781 = vmatpush1.msra.mxu0 %v747
    %782 = vmatprep.subr.mxu0 0.0
    %783 = vmatpush1.msra.mxu0 0.0
    %784 = vmatprep.subr.mxu0 0.0
    %785 = vmatpush1.msra.mxu0 0.0
    %786 = vmatprep.subr.mxu0 0.0
    %787 = vmatpush1.msra.mxu0 0.0
    %788 = vmatprep.subr.mxu0 0.0
    %789 = vmatpush1.msra.mxu0 0.0
    %790 = vmatprep.subr.mxu0 0.0
    %791 = vmatpush1.msra.mxu0 0.0
    %792 = vmatprep.subr.mxu0 0.0
    %793 = vmatpush1.msra.mxu0 0.0
    %794 = vmatprep.subr.mxu0 0.0
    %795 = vmatpush1.msra.mxu0 0.0
    %796 = vmatprep.subr.mxu0 0.0
    %797 = vmatpush1.msra.mxu0 0.0
    %798 = vmatprep.subr.mxu0 0.0
    %799 = vmatpush1.msra.mxu0 0.0
    %800 = vmatprep.subr.mxu0 0.0
    %801 = vmatpush1.msra.mxu0 0.0
    %802 = vmatprep.subr.mxu0 0.0
    %803 = vmatpush1.msra.mxu0 0.0
    %804 = vmatprep.subr.mxu0 0.0
    %805 = vmatpush1.msra.mxu0 0.0
    %806 = vmatprep.subr.mxu0 0.0
    %807 = vmatpush1.msra.mxu0 0.0
    %808 = vmatprep.subr.mxu0 0.0
    %809 = vmatpush1.msra.mxu0 0.0
    %810 = vmatprep.subr.mxu0 0.0
    %811 = vmatpush1.msra.mxu0 0.0
    %812 = vmatprep.subr.mxu0 0.0
    %813 = vmatpush1.msra.mxu0 0.0
    %814 = vmatprep.mubr.f32.mxu0 0.0
    %815 = vmatmul.mubr.f32.gmra.mrb[0].mxu0 %v510
    %v816 = vpop.f32.mrb[0].mxu0
    %v817 = vadd.f32 0.0, %v816
    %v818 = vpop.f32.mrb[0].mxu0
    %v819 = vadd.f32 0.0, %v818
    %820 = vdwg.mxu0
    %821 = vmatprep.subr.mxu0 0.0
    %822 = vmatpush1.msra.mxu0 %v704
    %823 = vmatprep.subr.mxu0 0.0
    %824 = vmatpush1.msra.mxu0 %v707
    %825 = vmatprep.subr.mxu0 0.0
    %826 = vmatpush1.msra.mxu0 %v710
    %827 = vmatprep.subr.mxu0 0.0
    %828 = vmatpush1.msra.mxu0 %v713
    %829 = vmatprep.subr.mxu0 0.0
    %830 = vmatpush1.msra.mxu0 %v716
    %831 = vmatprep.subr.mxu0 0.0
    %832 = vmatpush1.msra.mxu0 %v719
    %833 = vmatprep.subr.mxu0 0.0
    %834 = vmatpush1.msra.mxu0 %v722
    %835 = vmatprep.subr.mxu0 0.0
    %836 = vmatpush1.msra.mxu0 %v725
    %837 = vmatprep.subr.mxu0 0.0
    %838 = vmatpush1.msra.mxu0 %v728
    %839 = vmatprep.subr.mxu0 0.0
    %840 = vmatpush1.msra.mxu0 %v731
    %841 = vmatprep.subr.mxu0 0.0
    %842 = vmatpush1.msra.mxu0 %v734
    %843 = vmatprep.subr.mxu0 0.0
    %844 = vmatpush1.msra.mxu0 %v737
    %845 = vmatprep.subr.mxu0 0.0
    %846 = vmatpush1.msra.mxu0 %v740
    %847 = vmatprep.subr.mxu0 0.0
    %848 = vmatpush1.msra.mxu0 %v743
    %849 = vmatprep.subr.mxu0 0.0
    %850 = vmatpush1.msra.mxu0 %v746
    %851 = vmatprep.subr.mxu0 0.0
    %852 = vmatpush1.msra.mxu0 %v749
    %853 = vmatprep.subr.mxu0 0.0
    %854 = vmatpush1.msra.mxu0 0.0
    %855 = vmatprep.subr.mxu0 0.0
    %856 = vmatpush1.msra.mxu0 0.0
    %857 = vmatprep.subr.mxu0 0.0
    %858 = vmatpush1.msra.mxu0 0.0
    %859 = vmatprep.subr.mxu0 0.0
    %860 = vmatpush1.msra.mxu0 0.0
    %861 = vmatprep.subr.mxu0 0.0
    %862 = vmatpush1.msra.mxu0 0.0
    %863 = vmatprep.subr.mxu0 0.0
    %864 = vmatpush1.msra.mxu0 0.0
    %865 = vmatprep.subr.mxu0 0.0
    %866 = vmatpush1.msra.mxu0 0.0
    %867 = vmatprep.subr.mxu0 0.0
    %868 = vmatpush1.msra.mxu0 0.0
    %869 = vmatprep.subr.mxu0 0.0
    %870 = vmatpush1.msra.mxu0 0.0
    %871 = vmatprep.subr.mxu0 0.0
    %872 = vmatpush1.msra.mxu0 0.0
    %873 = vmatprep.subr.mxu0 0.0
    %874 = vmatpush1.msra.mxu0 0.0
    %875 = vmatprep.subr.mxu0 0.0
    %876 = vmatpush1.msra.mxu0 0.0
    %877 = vmatprep.subr.mxu0 0.0
    %878 = vmatpush1.msra.mxu0 0.0
    %879 = vmatprep.subr.mxu0 0.0
    %880 = vmatpush1.msra.mxu0 0.0
    %881 = vmatprep.subr.mxu0 0.0
    %882 = vmatpush1.msra.mxu0 0.0
    %883 = vmatprep.subr.mxu0 0.0
    %884 = vmatpush1.msra.mxu0 0.0
    %885 = vmatprep.mubr.f32.mxu0 0.0
    %886 = vmatmul.mubr.f32.gmra.mrb[0].mxu0 %v510
    %v887 = vpop.f32.mrb[0].mxu0
    %v888 = vadd.f32 0.0, %v887
    %v889 = vpop.f32.mrb[0].mxu0
    %890 = vdwg.mxu0
    %v891 = vadd.f32 %v627, %v817
    %v892 = vadd.f32 %v629, %v819
    %s893 = scalar_lea.vmem %s4, 2
    %v894 = vld [vmem:[%s893] sm:$0x3]
    %v896 = vlaneseq
    %v897 = vshrl.u32 %v896, 7
    %v898 = vsub.s32 0, %v897
    %v899 = vrot.slane %v894, %v898
    %v900 = vlaneseq
    %v901 = vshrl.u32 %v900, 7
    %v902 = vsub.s32 1, %v901
    %v903 = vrot.slane %v894, %v902
    %v906 = vadd.f32 %v891, %v899
    %v907 = vadd.f32 %v892, %v903
    %v908 = vxor.u32 %v906, 2147483648
    %v909 = vxor.u32 %v907, 2147483648
    %v910 = vmul.f32 %v908, 1.442695
    %v911 = vpow.pop %v910
    %v912 = vmul.f32 %v909, 1.442695
    %v913 = vpow.pop %v912
    %v914 = vadd.f32 %v911, 1.0
    %v915 = vadd.f32 %v913, 1.0
    %v916 = vrcp.pop %v914
    %v917 = vmul.f32 1.0, %v916
    %v918 = vrcp.pop %v915
    %v919 = vmul.f32 1.0, %v918
    %s920 = scalar_lea.vmem %s5, 1
    %v921 = vld [vmem:[%s920] sm:$0x1]
    %v923 = vlaneseq
    %v924 = vshrl.u32 %v923, 7
    %v925 = vsub.s32 0, %v924
    %v926 = vrot.slane %v921, %v925
    %v928 = vadd.f32 %v698, %v926
    %s929 = scalar_lea.vmem %s6, 1
    %v930 = vld [vmem:[%s929] sm:$0x1]
    %v932 = vlaneseq
    %v933 = vshrl.u32 %v932, 7
    %v934 = vsub.s32 0, %v933
    %v935 = vrot.slane %v930, %v934
    %v937 = vadd.f32 %v888, %v935
    %v938 = vmul.f32 %v917, %v937
    %v939 = vadd.f32 %v928, %v938
    %v940 = vtanh.pop %v939
    %v941 = vsub.f32 1.0, %v919
    %v942 = vmul.f32 %v941, %v940
    %v943 = vmul.f32 %v919, %v510
    %v944 = vadd.f32 %v942, %v943
    %s945 = scalar_lea.vmem [#allocation9], 4
    %946 = vst [vmem:[%s945] sm:$0xf] %v944
    %v947 = vld [vmem:[#allocation7] sm:$0xff]
    %v948 = vld [vmem:[#allocation7 + $0x8] sm:$0xff]
    %v949 = vld [vmem:[#allocation7 + $0x10] sm:$0xff]
    %v950 = vld [vmem:[#allocation7 + $0x18] sm:$0xff]
    %v951 = vld [vmem:[#allocation7 + $0x20] sm:$0xff]
    %v952 = vld [vmem:[#allocation7 + $0x28] sm:$0xff]
    %v953 = vld [vmem:[#allocation7 + $0x30] sm:$0xff]
    %v954 = vld [vmem:[#allocation7 + $0x38] sm:$0xff]
    %v955 = vld [vmem:[#allocation7 + $0x40] sm:$0xff]
    %v956 = vld [vmem:[#allocation7 + $0x48] sm:$0xff]
    %v957 = vld [vmem:[#allocation7 + $0x50] sm:$0xff]
    %v958 = vld [vmem:[#allocation7 + $0x58] sm:$0xff]
    %v959 = vld [vmem:[#allocation7 + $0x60] sm:$0xff]
    %v960 = vld [vmem:[#allocation7 + $0x68] sm:$0xff]
    %v961 = vld [vmem:[#allocation7 + $0x70] sm:$0xff]
    %v962 = vld [vmem:[#allocation7 + $0x78] sm:$0xff]
    %v963 = vld [vmem:[%s8] sm:$0x1]
    %v965 = vlaneseq
    %v966 = vshrl.u32 %v965, 7
    %v967 = vsub.s32 0, %v966
    %v968 = vrot.slane %v963, %v967
    %970 = vmatprep.subr.mxu0 0.0
    %971 = vmatpush1.msra.mxu0 %v947
    %972 = vmatprep.subr.mxu0 0.0
    %973 = vmatpush1.msra.mxu0 %v948
    %974 = vmatprep.subr.mxu0 0.0
    %975 = vmatpush1.msra.mxu0 %v949
    %976 = vmatprep.subr.mxu0 0.0
    %977 = vmatpush1.msra.mxu0 %v950
    %978 = vmatprep.subr.mxu0 0.0
    %979 = vmatpush1.msra.mxu0 %v951
    %980 = vmatprep.subr.mxu0 0.0
    %981 = vmatpush1.msra.mxu0 %v952
    %982 = vmatprep.subr.mxu0 0.0
    %983 = vmatpush1.msra.mxu0 %v953
    %984 = vmatprep.subr.mxu0 0.0
    %985 = vmatpush1.msra.mxu0 %v954
    %986 = vmatprep.subr.mxu0 0.0
    %987 = vmatpush1.msra.mxu0 %v955
    %988 = vmatprep.subr.mxu0 0.0
    %989 = vmatpush1.msra.mxu0 %v956
    %990 = vmatprep.subr.mxu0 0.0
    %991 = vmatpush1.msra.mxu0 %v957
    %992 = vmatprep.subr.mxu0 0.0
    %993 = vmatpush1.msra.mxu0 %v958
    %994 = vmatprep.subr.mxu0 0.0
    %995 = vmatpush1.msra.mxu0 %v959
    %996 = vmatprep.subr.mxu0 0.0
    %997 = vmatpush1.msra.mxu0 %v960
    %998 = vmatprep.subr.mxu0 0.0
    %999 = vmatpush1.msra.mxu0 %v961
    %1000 = vmatprep.subr.mxu0 0.0
    %1001 = vmatpush1.msra.mxu0 %v962
    %1002 = vmatprep.subr.mxu0 0.0
    %1003 = vmatpush1.msra.mxu0 0.0
    %1004 = vmatprep.subr.mxu0 0.0
    %1005 = vmatpush1.msra.mxu0 0.0
    %1006 = vmatprep.subr.mxu0 0.0
    %1007 = vmatpush1.msra.mxu0 0.0
    %1008 = vmatprep.subr.mxu0 0.0
    %1009 = vmatpush1.msra.mxu0 0.0
    %1010 = vmatprep.subr.mxu0 0.0
    %1011 = vmatpush1.msra.mxu0 0.0
    %1012 = vmatprep.subr.mxu0 0.0
    %1013 = vmatpush1.msra.mxu0 0.0
    %1014 = vmatprep.subr.mxu0 0.0
    %1015 = vmatpush1.msra.mxu0 0.0
    %1016 = vmatprep.subr.mxu0 0.0
    %1017 = vmatpush1.msra.mxu0 0.0
    %1018 = vmatprep.subr.mxu0 0.0
    %1019 = vmatpush1.msra.mxu0 0.0
    %1020 = vmatprep.subr.mxu0 0.0
    %1021 = vmatpush1.msra.mxu0 0.0
    %1022 = vmatprep.subr.mxu0 0.0
    %1023 = vmatpush1.msra.mxu0 0.0
    %1024 = vmatprep.subr.mxu0 0.0
    %1025 = vmatpush1.msra.mxu0 0.0
    %1026 = vmatprep.subr.mxu0 0.0
    %1027 = vmatpush1.msra.mxu0 0.0
    %1028 = vmatprep.subr.mxu0 0.0
    %1029 = vmatpush1.msra.mxu0 0.0
    %1030 = vmatprep.subr.mxu0 0.0
    %1031 = vmatpush1.msra.mxu0 0.0
    %1032 = vmatprep.subr.mxu0 0.0
    %1033 = vmatpush1.msra.mxu0 0.0
    %1034 = vmatprep.mubr.f32.mxu0 0.0
    %1035 = vmatmul.mubr.f32.gmra.mrb[0].mxu0 %v944
    %v1036 = vpop.f32.mrb[0].mxu0
    %v1037 = vadd.f32 %v968, %v1036
    %v1038 = vpop.f32.mrb[0].mxu0
    %1039 = vdwg.mxu0
    %1040 = vst [vmem:[#allocation8] sm:$0xf] %v1037
    // Predicated region
    $region50: #{_decoder_step.1} parent=1 // pred_check
      _
    $region51: #{_decoder_step.1} parent=1 // pred_check_branch
      %1042 = sbr.rel (0) target = $region53
    $region52: #{_decoder_step.1} parent=1 // pred_region
      %s1044 = ssub.s32 64, 64
      %1045 = vsyncadd [#allocation4], %s1044
      %s1047 = sshll.u32 [#allocation8], 4
      %s1048 = int_to_ptr.vmem [resolvable:$true] %s1047
      %1050 = dma.vmem_to_hbm [thread:$0]  %s1048, 64, %s9, [#allocation4]
    $region53: #{_decoder_step.1} parent=1 // pred_fallthru
      _
    // Predicated region
    $region54: #{_decoder_step.1} parent=1 // pred_check
      _
    $region55: #{_decoder_step.1} parent=1 // pred_check_branch
      %1052 = sbr.rel (0) target = $region57
    $region56: #{_decoder_step.1} parent=1 // pred_region
      %s1054 = ssub.s32 128, 128
      %1055 = vsyncadd [#allocation10], %s1054
      %s1056 = sshll.u32 [#allocation9], 4
      %s1057 = int_to_ptr.vmem [resolvable:$true] %s1056
      %1062 = dma.vmem_to_hbm [thread:$0]  %s1057, 128, %s10, [#allocation10], 64, 64, 4
    $region57: #{_decoder_step.1} parent=1 // pred_fallthru
      _
    // Predicated region
    $region58: #{_decoder_step.1} parent=1 // pred_check
      _
    $region59: #{_decoder_step.1} parent=1 // pred_check_branch
      %1064 = sbr.rel (0) target = $region61
    $region60: #{_decoder_step.1} parent=1 // pred_region
      %1065 = dma.done [#allocation4], 64
    $region61: #{_decoder_step.1} parent=1 // pred_fallthru
      _
    // Predicated region
    $region62: #{_decoder_step.1} parent=1 // pred_check
      _
    $region63: #{_decoder_step.1} parent=1 // pred_check_branch
      %1067 = sbr.rel (0) target = $region65
    $region64: #{_decoder_step.1} parent=1 // pred_region
      %1068 = dma.done [#allocation10], 128
    $region65: #{_decoder_step.1} parent=1 // pred_fallthru
      _
    %1069 = vsyncpa [#allocation3], 1
    %1070 = vsyncpa [#allocation6], 1
    %1071 = vsyncpa [#allocation4], 1
    %1072 = vsyncpa [#allocation10], 1

</llo_original>
